<compile_context>
chip_gen: v7x
topology: tpu7x:2x2x1
jax: 0.10.0
libtpu: 0.0.40
codegen_flags: <defaults>
</compile_context>

<pallas_src>
import jax
import jax.numpy as jnp
from jax import lax
from jax.experimental import pallas as pl
from jax.experimental.pallas import tpu as pltpu

DEFAULT_CONTRASTIVE_RATE = 0.5

# Conservative fallback if hardware introspection is unavailable
# (v7x per-TensorCore VMEM size, safe everywhere).
_FALLBACK_VMEM_CAPACITY = 64 * 1024 * 1024


def _device_kind():
    try:
        return jax.devices()[0].device_kind.lower()
    except Exception:
        return ""


def _vmem_capacity_bytes():
    try:
        return int(pltpu.get_tpu_info().vmem_capacity_bytes)
    except Exception:
        return _FALLBACK_VMEM_CAPACITY


def _vmem_budgets():
    cap = _vmem_capacity_bytes()
    # Resident input-tile budget (4 inputs x 2 pipeline buffers) and the
    # scoped VMEM limit, both derived from the chip generation's capacity.
    tile_budget = min(cap // 2, 64 * 1024 * 1024)
    vmem_limit = min((cap * 3) // 4, 96 * 1024 * 1024)
    return tile_budget, vmem_limit


def _num_tensorcores():
    """Best-effort TensorCores-per-chip detection (2 on v7x / megacore)."""
    try:
        info = pltpu.get_tpu_info()
        for name in ("num_cores", "core_count", "num_tensorcores"):
            val = getattr(info, name, None)
            if val:
                return max(1, min(2, int(val)))
    except Exception:
        pass
    kind = _device_kind()
    if any(tag in kind for tag in ("v7", "7x", "v4", "v5p")):
        return 2
    return 1


def _has_fast_low_precision_valu():
    # v6e / v7x have native bf16 VALU; v5e and older do not.
    kind = _device_kind()
    return any(tag in kind for tag in ("v6", "v7", "7x"))


def _choose_tile_rows(batch, hidden, itemsize, tile_budget, sublane_align):
    # 4 inputs, each double-buffered by the Pallas pipeline.
    bytes_per_row = 4 * 2 * hidden * itemsize
    tb = tile_budget // max(1, bytes_per_row)
    if tb >= batch:
        return batch                       # single full block
    return max(sublane_align, (tb // sublane_align) * sublane_align)


def _as_2d(x):
    x = jnp.asarray(x)
    if x.ndim == 0:
        return x.reshape(1, 1)
    if x.ndim == 1:
        return x.reshape(1, -1)
    if x.ndim > 2:
        return x.reshape(-1, x.shape[-1])
    return x


def _make_kernel(*, batch, tile_rows, hidden, tiles_per_core, acc_rows,
                 cast_inputs, need_mask):
    def kernel(p0_ref, p1_ref, t0_ref, t1_ref, o_ref):
        i = pl.program_id(1)

        @pl.when(i == 0)
        def _init():
            o_ref[...] = jnp.zeros_like(o_ref)

        if cast_inputs:
            p0 = p0_ref[...].astype(jnp.float32)
            p1 = p1_ref[...].astype(jnp.float32)
            t0 = t0_ref[...].astype(jnp.float32)
            t1 = t1_ref[...].astype(jnp.float32)
            diffs = (p0 - t0, p1 - t1, p1 - p0, t1 - t0)
        else:
            # Narrow-dtype fast path (v6e/v7x): subtract in the input dtype,
            # cast only the difference to f32 before squaring / accumulating.
            p0, p1, t0, t1 = p0_ref[...], p1_ref[...], t0_ref[...], t1_ref[...]
            diffs = tuple((a - b).astype(jnp.float32)
                          for a, b in ((p0, t0), (p1, t1), (p1, p0), (t1, t0)))

        sqs = tuple(d * d for d in diffs)

        def _reduce(sq):
            if acc_rows == 8:
                # (TB, H) -> (TB//8, 8, H) -> sum over leading axis: pure
                # full-vreg VALU adds; the final 8->1 + cross-lane reduce
                # happens once in the JAX wrapper, not per step.
                return sq.reshape(tile_rows // 8, 8, hidden).sum(axis=0)
            return jnp.sum(sq, axis=0, keepdims=True)

        def _accumulate(mask):
            for j, sq in enumerate(sqs):
                if mask is not None:
                    # jnp.where (not multiply): padded rows may hold inf/nan.
                    sq = jnp.where(mask, sq, 0.0)
                o_ref[0, j] += _reduce(sq)

        if need_mask:
            c = pl.program_id(0)
            blk = c * tiles_per_core + i            # logical (unclamped) tile
            tile_is_partial = (blk + 1) * tile_rows > batch

            # Steady-state tiles take the unmasked path; only ragged /
            # phantom tail tiles pay for the row mask.
            @pl.when(jnp.logical_not(tile_is_partial))
            def _full_tile():
                _accumulate(None)

            @pl.when(tile_is_partial)
            def _tail_tile():
                rows = blk * tile_rows + lax.broadcasted_iota(
                    jnp.int32, (tile_rows, 1), 0)
                _accumulate(rows < batch)
        else:
            _accumulate(None)

    return kernel


def representation_loss(pred_reps, target_reps,
                        contrastive_rate=DEFAULT_CONTRASTIVE_RATE,
                        tile_rows=None, num_cores=None,
                        diff_in_input_dtype=None):
    """JAX/Pallas equivalent of RepresentationLoss.forward."""
    assert len(pred_reps) == len(target_reps) == 2
    p0, p1 = map(_as_2d, pred_reps)
    t0, t1 = map(_as_2d, target_reps)
    assert p0.shape == p1.shape == t0.shape == t1.shape

    dtype = jnp.result_type(p0, p1, t0, t1)
    p0, p1, t0, t1 = (x.astype(dtype) for x in (p0, p1, t0, t1))
    itemsize = jnp.dtype(dtype).itemsize
    batch, hidden = p0.shape

    tile_budget, vmem_limit = _vmem_budgets()
    # Sublane packing: 8 rows for 4-byte dtypes, 16 for bf16, 32 for int8/fp8.
    sublane_align = max(8, 32 // max(1, itemsize))

    if tile_rows is None:
        tile_rows = _choose_tile_rows(batch, hidden, itemsize,
                                      tile_budget, sublane_align)
    tile_rows = min(int(tile_rows), batch)
    if tile_rows < batch:
        tile_rows = max(sublane_align,
                        (tile_rows // sublane_align) * sublane_align)
    num_tiles = pl.cdiv(batch, tile_rows)

    if num_cores is None:
        num_cores = _num_tensorcores()
    num_cores = max(1, min(int(num_cores), num_tiles))
    tiles_per_core = pl.cdiv(num_tiles, num_cores)

    # Masking needed for ragged tail rows and/or phantom tiles (uneven split).
    need_mask = (batch % tile_rows != 0) or (num_cores * tiles_per_core != num_tiles)

    if diff_in_input_dtype is None:
        diff_in_input_dtype = (itemsize < 4) and _has_fast_low_precision_valu()
    cast_inputs = not (diff_in_input_dtype and itemsize < 4)

    acc_rows = 8 if tile_rows % 8 == 0 else 1

    kernel = _make_kernel(batch=batch, tile_rows=tile_rows, hidden=hidden,
                          tiles_per_core=tiles_per_core, acc_rows=acc_rows,
                          cast_inputs=cast_inputs, need_mask=need_mask)

    last_block = num_tiles - 1

    def in_index_map(c, i):
        blk = c * tiles_per_core + i
        # Clamp phantom tiles (uneven core split) onto the last real tile;
        # their rows are fully masked out inside the kernel.
        return (jnp.minimum(blk, last_block), 0)

    in_spec = pl.BlockSpec((tile_rows, hidden), in_index_map)
    # Per-core partial sums-of-squares; sqrt/relu/mix run in the wrapper.
    # TODO(synk): if a v7x profile still shows exposed DMA after the 2-core
    # split, sweep pipeline_mode=pl.Buffered(3) on the four input specs.
    out_spec = pl.BlockSpec((1, 4, acc_rows, hidden),
                            lambda c, i: (c, 0, 0, 0))

    partials = pl.pallas_call(
        kernel,
        out_shape=jax.ShapeDtypeStruct((num_cores, 4, acc_rows, hidden),
                                       jnp.float32),
        grid_spec=pltpu.PrefetchScalarGridSpec(
            num_scalar_prefetch=0,
            grid=(num_cores, tiles_per_core),
            in_specs=[in_spec] * 4,
            out_specs=out_spec,
        ),
        compiler_params=pltpu.CompilerParams(
            dimension_semantics=("parallel", "arbitrary"),
            vmem_limit_bytes=vmem_limit,
        ),
    )(p0, p1, t0, t1)

    # Tiny epilogue in plain JAX: reduce (cores, 4, acc_rows, hidden) partials.
    sums = jnp.sum(partials, axis=(0, 2, 3))           # (4,) f32
    norms = jnp.sqrt(sums)                              # ||p0-t0||, ||p1-t1||,
    cr = float(contrastive_rate)                        # ||p1-p0||, ||t1-t0||
    similarity = 0.5 * (norms[0] + norms[1])
    contrastiveness = jnp.maximum(norms[3] - norms[2], 0.0)
    sim_term = (1.0 - cr) * similarity
    con_term = cr * contrastiveness
    return {
        "Similarity": sim_term,
        "Contrastiveness": con_term,
        "Total Loss": sim_term + con_term,
    }


def _reference(pred_reps, target_reps,
               contrastive_rate=DEFAULT_CONTRASTIVE_RATE):
    # Pure-JAX reference for a sanity check.
    p0, p1 = (jnp.asarray(x, jnp.float32) for x in pred_reps)
    t0, t1 = (jnp.asarray(x, jnp.float32) for x in target_reps)
    fro = lambda x: jnp.sqrt(jnp.sum(x * x))
    sim = (fro(p0 - t0) + fro(p1 - t1)) / 2.0
    contrast = jnp.maximum(fro(t1 - t0) - fro(p1 - p0), 0.0)
    sim_t = (1.0 - contrastive_rate) * sim
    con_t = contrastive_rate * contrast
    return {"Similarity": sim_t, "Contrastiveness": con_t,
            "Total Loss": sim_t + con_t}


if __name__ == "__main__":
    key = jax.random.PRNGKey(0)

    def _check(case_id, batch, hidden, dtype, tol, **kwargs):
        ks = jax.random.split(jax.random.fold_in(key, case_id), 4)
        mk = lambda k: jax.random.normal(
            k, (batch, hidden), jnp.float32).astype(dtype)
        p0, p1, t0, t1 = (mk(k) for k in ks)
        out = representation_loss([p0, p1], [t0, t1],
                                  contrastive_rate=0.5, **kwargs)
        out = jax.block_until_ready(out)
        ref = _reference([p0, p1], [t0, t1], 0.5)
        for name in ("Similarity", "Contrastiveness", "Total Loss"):
            assert jnp.allclose(out[name], ref[name], rtol=tol, atol=tol), (
                case_id, name, out[name], ref[name])

    # 1) multi-tile f32 path: grid pipelining + cross-step accumulation.
    _check(0, batch=16, hidden=32, dtype=jnp.float32, tol=1e-5,
           tile_rows=8, num_cores=1)
    # 2) ragged batch: masked final (partial) tile (pl.when-gated mask).
    _check(1, batch=10, hidden=32, dtype=jnp.float32, tol=1e-5,
           tile_rows=8, num_cores=1)
    # 3) single full-block path with auto tile / core selection.
    _check(2, batch=2, hidden=32, dtype=jnp.float32, tol=1e-5)
    # 4) bf16 inputs, cast-first (exact) path, f32 accumulation.
    _check(3, batch=32, hidden=32, dtype=jnp.bfloat16, tol=1e-4,
           tile_rows=16, num_cores=1, diff_in_input_dtype=False)
    # 5) bf16 inputs, native-dtype subtract fast path (v6e/v7x-style).
    _check(4, batch=32, hidden=32, dtype=jnp.bfloat16, tol=5e-2,
           tile_rows=16, num_cores=1, diff_in_input_dtype=True)
    # 6) 2-core split with ragged tail + phantom tile (clamped & masked).
    _check(5, batch=20, hidden=32, dtype=jnp.float32, tol=1e-5,
           tile_rows=8, num_cores=2)
    # 7) 2-core split, even tile division (no mask code compiled).
    _check(6, batch=32, hidden=32, dtype=jnp.float32, tol=1e-5,
           tile_rows=8, num_cores=2)

    print("KERNEL_OK")
</pallas_src>

<mosaic_0001>
module attributes {stable_mosaic.version = 11 : i64} {
  func.func @kernel(%arg0: i32, %arg1: i32, %arg2: memref<8x32xf32, #tpu.memory_space<vmem>>, %arg3: memref<8x32xf32, #tpu.memory_space<vmem>>, %arg4: memref<8x32xf32, #tpu.memory_space<vmem>>, %arg5: memref<8x32xf32, #tpu.memory_space<vmem>>, %arg6: memref<1x4x8x32xf32, #tpu.memory_space<vmem>>) attributes {dimension_semantics = [#tpu.dimension_semantics<parallel>, #tpu.dimension_semantics<arbitrary>], iteration_bounds = array<i64: 1, 2>, scalar_prefetch = 0 : i64, scratch_operands = 0 : i64, tpu.core_type = #tpu.core_type<tc>, window_params = [{transform_indices = @transform_0, window_bounds = array<i64: 8, 32>}, {transform_indices = @transform_1, window_bounds = array<i64: 8, 32>}, {transform_indices = @transform_2, window_bounds = array<i64: 8, 32>}, {transform_indices = @transform_3, window_bounds = array<i64: 8, 32>}, {transform_indices = @transform_4, window_bounds = array<i64: 1, 4, 8, 32>}]} {
    %c0_i32 = arith.constant 0 : i32
    %0 = arith.cmpi eq, %arg1, %c0_i32 : i32
    %1 = arith.extui %0 : i1 to i32
    %c0_i32_0 = arith.constant 0 : i32
    %2 = arith.cmpi ne, %1, %c0_i32_0 : i32
    scf.if %2 {
      %cst_40 = arith.constant 0.000000e+00 : f32
      %47 = vector.broadcast %cst_40 : f32 to vector<1x4x8x32xf32>
      %c0_41 = arith.constant 0 : index
      %c0_42 = arith.constant 0 : index
      %c0_43 = arith.constant 0 : index
      %c0_44 = arith.constant 0 : index
      %48 = vector.load %arg6[%c0_41, %c0_42, %c0_43, %c0_44] : memref<1x4x8x32xf32, #tpu.memory_space<vmem>>, vector<1x4x8x32xf32>
      tpu.vector_store %arg6[%c0_41, %c0_42, %c0_43, %c0_44], %47 {strides = array<i32>} : memref<1x4x8x32xf32, #tpu.memory_space<vmem>>, vector<1x4x8x32xf32>,
    } else {
    }
    %c0 = arith.constant 0 : index
    %c0_1 = arith.constant 0 : index
    %3 = vector.load %arg2[%c0, %c0_1] : memref<8x32xf32, #tpu.memory_space<vmem>>, vector<8x32xf32>
    %c0_2 = arith.constant 0 : index
    %c0_3 = arith.constant 0 : index
    %4 = vector.load %arg3[%c0_2, %c0_3] : memref<8x32xf32, #tpu.memory_space<vmem>>, vector<8x32xf32>
    %c0_4 = arith.constant 0 : index
    %c0_5 = arith.constant 0 : index
    %5 = vector.load %arg4[%c0_4, %c0_5] : memref<8x32xf32, #tpu.memory_space<vmem>>, vector<8x32xf32>
    %c0_6 = arith.constant 0 : index
    %c0_7 = arith.constant 0 : index
    %6 = vector.load %arg5[%c0_6, %c0_7] : memref<8x32xf32, #tpu.memory_space<vmem>>, vector<8x32xf32>
    %7 = arith.subf %3, %5 : vector<8x32xf32>
    %8 = arith.subf %4, %6 : vector<8x32xf32>
    %9 = arith.subf %4, %3 : vector<8x32xf32>
    %10 = arith.subf %6, %5 : vector<8x32xf32>
    %11 = arith.mulf %7, %7 : vector<8x32xf32>
    %12 = arith.mulf %8, %8 : vector<8x32xf32>
    %13 = arith.mulf %9, %9 : vector<8x32xf32>
    %14 = arith.mulf %10, %10 : vector<8x32xf32>
    %c0_8 = arith.constant 0 : index
    %c0_9 = arith.constant 0 : index
    %c0_10 = arith.constant 0 : index
    %c0_11 = arith.constant 0 : index
    %15 = vector.load %arg6[%c0_8, %c0_9, %c0_10, %c0_11] : memref<1x4x8x32xf32, #tpu.memory_space<vmem>>, vector<1x1x8x32xf32>
    %16 = vector.shape_cast %15 : vector<1x1x8x32xf32> to vector<8x32xf32>
    %17 = vector.shape_cast %11 : vector<8x32xf32> to vector<1x8x32xf32>
    %cst = arith.constant dense<0.000000e+00> : vector<8x32xf32>
    %18 = vector.multi_reduction <add>, %17, %cst [0] : vector<1x8x32xf32> to vector<8x32xf32>
    %19 = arith.addf %16, %18 : vector<8x32xf32>
    %c0_12 = arith.constant 0 : index
    %c0_13 = arith.constant 0 : index
    %c0_14 = arith.constant 0 : index
    %c0_15 = arith.constant 0 : index
    %20 = vector.load %arg6[%c0_12, %c0_13, %c0_14, %c0_15] : memref<1x4x8x32xf32, #tpu.memory_space<vmem>>, vector<1x1x8x32xf32>
    %21 = vector.shape_cast %20 : vector<1x1x8x32xf32> to vector<8x32xf32>
    %22 = vector.shape_cast %19 : vector<8x32xf32> to vector<1x1x8x32xf32>
    tpu.vector_store %arg6[%c0_12, %c0_13, %c0_14, %c0_15], %22 {strides = array<i32>} : memref<1x4x8x32xf32, #tpu.memory_space<vmem>>, vector<1x1x8x32xf32>,
    %c0_16 = arith.constant 0 : index
    %c1 = arith.constant 1 : index
    %c0_17 = arith.constant 0 : index
    %c0_18 = arith.constant 0 : index
    %23 = vector.load %arg6[%c0_16, %c1, %c0_17, %c0_18] : memref<1x4x8x32xf32, #tpu.memory_space<vmem>>, vector<1x1x8x32xf32>
    %24 = vector.shape_cast %23 : vector<1x1x8x32xf32> to vector<8x32xf32>
    %25 = vector.shape_cast %12 : vector<8x32xf32> to vector<1x8x32xf32>
    %cst_19 = arith.constant dense<0.000000e+00> : vector<8x32xf32>
    %26 = vector.multi_reduction <add>, %25, %cst_19 [0] : vector<1x8x32xf32> to vector<8x32xf32>
    %27 = arith.addf %24, %26 : vector<8x32xf32>
    %c0_20 = arith.constant 0 : index
    %c1_21 = arith.constant 1 : index
    %c0_22 = arith.constant 0 : index
    %c0_23 = arith.constant 0 : index
    %28 = vector.load %arg6[%c0_20, %c1_21, %c0_22, %c0_23] : memref<1x4x8x32xf32, #tpu.memory_space<vmem>>, vector<1x1x8x32xf32>
    %29 = vector.shape_cast %28 : vector<1x1x8x32xf32> to vector<8x32xf32>
    %30 = vector.shape_cast %27 : vector<8x32xf32> to vector<1x1x8x32xf32>
    tpu.vector_store %arg6[%c0_20, %c1_21, %c0_22, %c0_23], %30 {strides = array<i32>} : memref<1x4x8x32xf32, #tpu.memory_space<vmem>>, vector<1x1x8x32xf32>,
    %c0_24 = arith.constant 0 : index
    %c2 = arith.constant 2 : index
    %c0_25 = arith.constant 0 : index
    %c0_26 = arith.constant 0 : index
    %31 = vector.load %arg6[%c0_24, %c2, %c0_25, %c0_26] : memref<1x4x8x32xf32, #tpu.memory_space<vmem>>, vector<1x1x8x32xf32>
    %32 = vector.shape_cast %31 : vector<1x1x8x32xf32> to vector<8x32xf32>
    %33 = vector.shape_cast %13 : vector<8x32xf32> to vector<1x8x32xf32>
    %cst_27 = arith.constant dense<0.000000e+00> : vector<8x32xf32>
    %34 = vector.multi_reduction <add>, %33, %cst_27 [0] : vector<1x8x32xf32> to vector<8x32xf32>
    %35 = arith.addf %32, %34 : vector<8x32xf32>
    %c0_28 = arith.constant 0 : index
    %c2_29 = arith.constant 2 : index
    %c0_30 = arith.constant 0 : index
    %c0_31 = arith.constant 0 : index
    %36 = vector.load %arg6[%c0_28, %c2_29, %c0_30, %c0_31] : memref<1x4x8x32xf32, #tpu.memory_space<vmem>>, vector<1x1x8x32xf32>
    %37 = vector.shape_cast %36 : vector<1x1x8x32xf32> to vector<8x32xf32>
    %38 = vector.shape_cast %35 : vector<8x32xf32> to vector<1x1x8x32xf32>
    tpu.vector_store %arg6[%c0_28, %c2_29, %c0_30, %c0_31], %38 {strides = array<i32>} : memref<1x4x8x32xf32, #tpu.memory_space<vmem>>, vector<1x1x8x32xf32>,
    %c0_32 = arith.constant 0 : index
    %c3 = arith.constant 3 : index
    %c0_33 = arith.constant 0 : index
    %c0_34 = arith.constant 0 : index
    %39 = vector.load %arg6[%c0_32, %c3, %c0_33, %c0_34] : memref<1x4x8x32xf32, #tpu.memory_space<vmem>>, vector<1x1x8x32xf32>
    %40 = vector.shape_cast %39 : vector<1x1x8x32xf32> to vector<8x32xf32>
    %41 = vector.shape_cast %14 : vector<8x32xf32> to vector<1x8x32xf32>
    %cst_35 = arith.constant dense<0.000000e+00> : vector<8x32xf32>
    %42 = vector.multi_reduction <add>, %41, %cst_35 [0] : vector<1x8x32xf32> to vector<8x32xf32>
    %43 = arith.addf %40, %42 : vector<8x32xf32>
    %c0_36 = arith.constant 0 : index
    %c3_37 = arith.constant 3 : index
    %c0_38 = arith.constant 0 : index
    %c0_39 = arith.constant 0 : index
    %44 = vector.load %arg6[%c0_36, %c3_37, %c0_38, %c0_39] : memref<1x4x8x32xf32, #tpu.memory_space<vmem>>, vector<1x1x8x32xf32>
    %45 = vector.shape_cast %44 : vector<1x1x8x32xf32> to vector<8x32xf32>
    %46 = vector.shape_cast %43 : vector<8x32xf32> to vector<1x1x8x32xf32>
    tpu.vector_store %arg6[%c0_36, %c3_37, %c0_38, %c0_39], %46 {strides = array<i32>} : memref<1x4x8x32xf32, #tpu.memory_space<vmem>>, vector<1x1x8x32xf32>,
    return
  }
  func.func @transform_0(%arg0: i32, %arg1: i32) -> (i32, i32) {
    %c2_i32 = arith.constant 2 : i32
    %0 = arith.muli %arg0, %c2_i32 : i32
    %1 = arith.addi %0, %arg1 : i32
    %c1_i32 = arith.constant 1 : i32
    %2 = arith.minsi %1, %c1_i32 : i32
    %c0_i32 = arith.constant 0 : i32
    %c0_i32_0 = arith.constant 0 : i32
    return %2, %c0_i32 : i32, i32
  }
  func.func @transform_1(%arg0: i32, %arg1: i32) -> (i32, i32) {
    %c2_i32 = arith.constant 2 : i32
    %0 = arith.muli %arg0, %c2_i32 : i32
    %1 = arith.addi %0, %arg1 : i32
    %c1_i32 = arith.constant 1 : i32
    %2 = arith.minsi %1, %c1_i32 : i32
    %c0_i32 = arith.constant 0 : i32
    %c0_i32_0 = arith.constant 0 : i32
    return %2, %c0_i32 : i32, i32
  }
  func.func @transform_2(%arg0: i32, %arg1: i32) -> (i32, i32) {
    %c2_i32 = arith.constant 2 : i32
    %0 = arith.muli %arg0, %c2_i32 : i32
    %1 = arith.addi %0, %arg1 : i32
    %c1_i32 = arith.constant 1 : i32
    %2 = arith.minsi %1, %c1_i32 : i32
    %c0_i32 = arith.constant 0 : i32
    %c0_i32_0 = arith.constant 0 : i32
    return %2, %c0_i32 : i32, i32
  }
  func.func @transform_3(%arg0: i32, %arg1: i32) -> (i32, i32) {
    %c2_i32 = arith.constant 2 : i32
    %0 = arith.muli %arg0, %c2_i32 : i32
    %1 = arith.addi %0, %arg1 : i32
    %c1_i32 = arith.constant 1 : i32
    %2 = arith.minsi %1, %c1_i32 : i32
    %c0_i32 = arith.constant 0 : i32
    %c0_i32_0 = arith.constant 0 : i32
    return %2, %c0_i32 : i32, i32
  }
  func.func @transform_4(%arg0: i32, %arg1: i32) -> (i32, i32, i32, i32) {
    %c0_i32 = arith.constant 0 : i32
    %c0_i32_0 = arith.constant 0 : i32
    %c0_i32_1 = arith.constant 0 : i32
    %c0_i32_2 = arith.constant 0 : i32
    return %arg0, %c0_i32, %c0_i32_0, %c0_i32_1 : i32, i32, i32, i32
  }
}

</mosaic_0001>

<llo_original>
// kernel: tpu_custom_call.1
$region0: #{tpu_custom_call.1}
  #allocation0 [shape = 'u32[]', space=smem, size = 0x4, offset = 0x4, fixed_abs, tag = 'smem constant byte address 0x4 - core index']
  #allocation1 [shape = 'u32[144,128]{1,0:T(1,128)}', space=vmem, size = 0x12000, scoped, tag = 'internal scratch']
  %s0 = inlined_call_operand.hbm [shape: f32[16,32], index: 0, kind: input, shape index: {}]
  %s1 = inlined_call_operand.hbm [shape: f32[16,32], index: 1, kind: input, shape index: {}]
  %s2 = inlined_call_operand.hbm [shape: f32[16,32], index: 2, kind: input, shape index: {}]
  %s3 = inlined_call_operand.hbm [shape: f32[16,32], index: 3, kind: input, shape index: {}]
  %s4 = inlined_call_operand.hbm [shape: f32[1,4,8,32], index: 4, kind: output, shape index: {}]
  %s5 = sld [smem:[#allocation0]]
  $region69: #{tpu_custom_call.1} parent=0
    _
  %s7 = ssub.s32 1, %s5
  %s8 = scalar_select 0, %s7, %s5
  $region1: #{tpu_custom_call.1} parent=0
    #allocation2 [shape = 'u8[8192]{0}', space=vmem, size = 0x2000, scoped, tag = 'input window, operand 0']
    #allocation3 [shape = 's32[2]{0}', space=sflag, size = 0x8, scoped, tag = 'scoped memory for tpu_custom_call.1']
    #allocation4 [shape = 's32[2]{0}', space=sflag, size = 0x8, scoped, tag = 'scoped memory for tpu_custom_call.1']
    #allocation5 [shape = 'u8[8192]{0}', space=vmem, size = 0x2000, scoped, tag = 'input window, operand 1']
    #allocation6 [shape = 's32[2]{0}', space=sflag, size = 0x8, scoped, tag = 'scoped memory for tpu_custom_call.1']
    #allocation7 [shape = 'u8[8192]{0}', space=vmem, size = 0x2000, scoped, tag = 'input window, operand 2']
    #allocation8 [shape = 'u8[8192]{0}', space=vmem, size = 0x2000, scoped, tag = 'input window, operand 3']
    #allocation9 [shape = 's32[2]{0}', space=sflag, size = 0x8, scoped, tag = 'scoped memory for tpu_custom_call.1']
    #allocation10 [shape = 'u8[16384]{0}', space=vmem, size = 0x4000, scoped, tag = 'output window, operand 0, single buffered']
    %9 = vsyncpa [#allocation3], 0
    %s10 = scalar_lea.sflag [#allocation3], 1
    %11 = vsyncpa %s10, 0
    %12 = vsyncpa [#allocation6], 0
    %s13 = scalar_lea.sflag [#allocation6], 1
    %14 = vsyncpa %s13, 0
    %15 = vsyncpa [#allocation9], 0
    %s16 = scalar_lea.sflag [#allocation9], 1
    %17 = vsyncpa %s16, 0
    %18 = vsyncpa [#allocation4], 0
    loop: start=0, step=1, limit=4
    $region2: #{tpu_custom_call.1} parent=1 // loop_pre_header
      _
    $region3: #{tpu_custom_call.1} parent=1 // loop_header
      %s20 = sphi 0, %s24
      %p21 = scmp.ge.s32.totalorder %s20, 4
      %s27 = sphi 0, %s39
      %s28 = sphi 0, %s35
      %s29 = sphi 0, %s27
      %s30 = sphi 0, %s28
      %s31 = sphi 0, %s29
      %s32 = sphi 0, %s30
      %s50 = sphi 0, %s52
      %s53 = sphi 0, %s50
      %s54 = sphi 0, %s53
      %s70 = sphi 0, %s54
      %s84 = sphi 0, %s86
      %s87 = sphi 0, %s84
      %s88 = sphi 0, %s87
      %s104 = sphi 0, %s88
      %s118 = sphi 0, %s120
      %s121 = sphi 0, %s118
      %s122 = sphi 0, %s121
      %s138 = sphi 0, %s122
      %s152 = sphi 0, %s154
      %s155 = sphi 0, %s152
      %s156 = sphi 0, %s155
      %s172 = sphi 0, %s156
      %s178 = sphi 0, %s180
      %s181 = sphi 0, %s178
      %s182 = sphi 0, %s181
      %s198 = sphi 0, %s182
    $region4: #{tpu_custom_call.1} parent=1 // loop_header_branch
      %23 = sbr.rel (%p21) target = $region8
    $region5: #{tpu_custom_call.1} parent=1 // loop_body
      %s25 = ssub.s32 %s20, 1
      %s26 = ssub.s32 %s20, 2
      %s33 = sadd.s32 1, %s28
      %p34 = scmp.ge.s32.totalorder %s33, 2
      %s35 = scalar_select %p34, 0, %s33
      %s36 = sadd.s32 1, %s27
      %s37 = scalar_select %p34, %s36, %s27
      %p38 = scmp.ge.s32.totalorder %s37, 1
      %s39 = scalar_select %p38, 0, %s37
      %s40 = smul.u32 %s27, 2
      %s41 = sadd.s32 %s40, %s28
      %p42 = scmp.lt.s32.totalorder %s41, 1
      %s43 = scalar_select %p42, %s41, 1
      %s44 = smul.u32 %s39, 2
      %s45 = sadd.s32 %s44, %s35
      %p46 = scmp.lt.s32.totalorder %s45, 1
      %s47 = scalar_select %p46, %s45, 1
      %s48 = ssub.s32 %s43, %s47
      %p49 = scmp.eq.s32.totalorder %s48, 0
      %s51 = sadd.s32 %s50, 1
      %s52 = scalar_select %p49, %s50, %s51
      %p55 = pneg %p49
      %p56 = scmp.eq.s32.totalorder %s20, 1
      %p57 = por %p55, %p56
      %p58 = scmp.ne.s32.totalorder %s50, %s53
      %p59 = scmp.eq.s32.totalorder %s20, 0
      %p60 = por %p58, %p59
      %p61 = scmp.ne.s32.totalorder %s50, %s53
      %p62 = scmp.eq.s32.totalorder %s25, 1
      %p63 = por %p61, %p62
      %p64 = scmp.ne.s32.totalorder %s53, %s54
      %p65 = scmp.eq.s32.totalorder %s25, 0
      %p66 = por %p64, %p65
      %p67 = scmp.ne.s32.totalorder %s53, %s54
      %p68 = scmp.eq.s32.totalorder %s26, 1
      %p69 = por %p67, %p68
      %p71 = scmp.ne.s32.totalorder %s54, %s70
      %p72 = scmp.eq.s32.totalorder %s26, 0
      %p73 = por %p71, %p72
      %s74 = smul.u32 %s27, 2
      %s75 = sadd.s32 %s74, %s28
      %p76 = scmp.lt.s32.totalorder %s75, 1
      %s77 = scalar_select %p76, %s75, 1
      %s78 = smul.u32 %s39, 2
      %s79 = sadd.s32 %s78, %s35
      %p80 = scmp.lt.s32.totalorder %s79, 1
      %s81 = scalar_select %p80, %s79, 1
      %s82 = ssub.s32 %s77, %s81
      %p83 = scmp.eq.s32.totalorder %s82, 0
      %s85 = sadd.s32 %s84, 1
      %s86 = scalar_select %p83, %s84, %s85
      %p89 = pneg %p83
      %p90 = scmp.eq.s32.totalorder %s20, 1
      %p91 = por %p89, %p90
      %p92 = scmp.ne.s32.totalorder %s84, %s87
      %p93 = scmp.eq.s32.totalorder %s20, 0
      %p94 = por %p92, %p93
      %p95 = scmp.ne.s32.totalorder %s84, %s87
      %p96 = scmp.eq.s32.totalorder %s25, 1
      %p97 = por %p95, %p96
      %p98 = scmp.ne.s32.totalorder %s87, %s88
      %p99 = scmp.eq.s32.totalorder %s25, 0
      %p100 = por %p98, %p99
      %p101 = scmp.ne.s32.totalorder %s87, %s88
      %p102 = scmp.eq.s32.totalorder %s26, 1
      %p103 = por %p101, %p102
      %p105 = scmp.ne.s32.totalorder %s88, %s104
      %p106 = scmp.eq.s32.totalorder %s26, 0
      %p107 = por %p105, %p106
      %s108 = smul.u32 %s27, 2
      %s109 = sadd.s32 %s108, %s28
      %p110 = scmp.lt.s32.totalorder %s109, 1
      %s111 = scalar_select %p110, %s109, 1
      %s112 = smul.u32 %s39, 2
      %s113 = sadd.s32 %s112, %s35
      %p114 = scmp.lt.s32.totalorder %s113, 1
      %s115 = scalar_select %p114, %s113, 1
      %s116 = ssub.s32 %s111, %s115
      %p117 = scmp.eq.s32.totalorder %s116, 0
      %s119 = sadd.s32 %s118, 1
      %s120 = scalar_select %p117, %s118, %s119
      %p123 = pneg %p117
      %p124 = scmp.eq.s32.totalorder %s20, 1
      %p125 = por %p123, %p124
      %p126 = scmp.ne.s32.totalorder %s118, %s121
      %p127 = scmp.eq.s32.totalorder %s20, 0
      %p128 = por %p126, %p127
      %p129 = scmp.ne.s32.totalorder %s118, %s121
      %p130 = scmp.eq.s32.totalorder %s25, 1
      %p131 = por %p129, %p130
      %p132 = scmp.ne.s32.totalorder %s121, %s122
      %p133 = scmp.eq.s32.totalorder %s25, 0
      %p134 = por %p132, %p133
      %p135 = scmp.ne.s32.totalorder %s121, %s122
      %p136 = scmp.eq.s32.totalorder %s26, 1
      %p137 = por %p135, %p136
      %p139 = scmp.ne.s32.totalorder %s122, %s138
      %p140 = scmp.eq.s32.totalorder %s26, 0
      %p141 = por %p139, %p140
      %s142 = smul.u32 %s27, 2
      %s143 = sadd.s32 %s142, %s28
      %p144 = scmp.lt.s32.totalorder %s143, 1
      %s145 = scalar_select %p144, %s143, 1
      %s146 = smul.u32 %s39, 2
      %s147 = sadd.s32 %s146, %s35
      %p148 = scmp.lt.s32.totalorder %s147, 1
      %s149 = scalar_select %p148, %s147, 1
      %s150 = ssub.s32 %s145, %s149
      %p151 = scmp.eq.s32.totalorder %s150, 0
      %s153 = sadd.s32 %s152, 1
      %s154 = scalar_select %p151, %s152, %s153
      %p157 = pneg %p151
      %p158 = scmp.eq.s32.totalorder %s20, 1
      %p159 = por %p157, %p158
      %p160 = scmp.ne.s32.totalorder %s152, %s155
      %p161 = scmp.eq.s32.totalorder %s20, 0
      %p162 = por %p160, %p161
      %p163 = scmp.ne.s32.totalorder %s152, %s155
      %p164 = scmp.eq.s32.totalorder %s25, 1
      %p165 = por %p163, %p164
      %p166 = scmp.ne.s32.totalorder %s155, %s156
      %p167 = scmp.eq.s32.totalorder %s25, 0
      %p168 = por %p166, %p167
      %p169 = scmp.ne.s32.totalorder %s155, %s156
      %p170 = scmp.eq.s32.totalorder %s26, 1
      %p171 = por %p169, %p170
      %p173 = scmp.ne.s32.totalorder %s156, %s172
      %p174 = scmp.eq.s32.totalorder %s26, 0
      %p175 = por %p173, %p174
      %s176 = ssub.s32 %s27, %s39
      %p177 = scmp.eq.s32.totalorder %s176, 0
      %s179 = sadd.s32 %s178, 1
      %s180 = scalar_select %p177, %s178, %s179
      %p183 = pneg %p177
      %p184 = scmp.eq.s32.totalorder %s20, 1
      %p185 = por %p183, %p184
      %p186 = scmp.ne.s32.totalorder %s178, %s181
      %p187 = scmp.eq.s32.totalorder %s20, 0
      %p188 = por %p186, %p187
      %p189 = scmp.ne.s32.totalorder %s178, %s181
      %p190 = scmp.eq.s32.totalorder %s25, 1
      %p191 = por %p189, %p190
      %p192 = scmp.ne.s32.totalorder %s181, %s182
      %p193 = scmp.eq.s32.totalorder %s25, 0
      %p194 = por %p192, %p193
      %p195 = scmp.ne.s32.totalorder %s181, %s182
      %p196 = scmp.eq.s32.totalorder %s26, 1
      %p197 = por %p195, %p196
      %p199 = scmp.ne.s32.totalorder %s182, %s198
      %p200 = scmp.eq.s32.totalorder %s26, 0
      %p201 = por %p199, %p200
      %p202 = scmp.le.s32.totalorder 1, %s20
      %p203 = scmp.lt.s32.totalorder %s20, 3
      %p204 = pnand %p202, %p203
      %p205 = pneg %p204
      // Predicated region
      $region9: #{tpu_custom_call.1} parent=5 // pred_check
        _
      $region10: #{tpu_custom_call.1} parent=5 // pred_check_branch
        %207 = sbr.rel (%p204) target = $region12
      $region11: #{tpu_custom_call.1} parent=5 // pred_region
        %s208 = ssub.s32 %s20, 1
      $region12: #{tpu_custom_call.1} parent=5 // pred_fallthru
        _
      %p209 = scmp.lt.s32.totalorder %s20, 2
      // Predicated region
      $region13: #{tpu_custom_call.1} parent=5 // pred_check
        %p210 = pneg %p209
      $region14: #{tpu_custom_call.1} parent=5 // pred_check_branch
        %212 = sbr.rel (%p210) target = $region16
      $region15: #{tpu_custom_call.1} parent=5 // pred_region
        // Predicated region
        $region17: #{tpu_custom_call.1} parent=15 // pred_check
          %p213 = pneg %p60
        $region18: #{tpu_custom_call.1} parent=15 // pred_check_branch
          %215 = sbr.rel (%p213) target = $region20
        $region19: #{tpu_custom_call.1} parent=15 // pred_region
          %s216 = sand.u32 %s50, 1
          %s217 = scalar_lea.sflag [#allocation3], %s216
          %s218 = sand.u32 %s50, 1
          %s219 = smul.addr %s218, 8
          %s220 = scalar_lea.vmem [#allocation2], %s219
          %s221 = smul.u32 %s27, 2
          %s222 = sadd.s32 %s221, %s28
          %p223 = scmp.lt.s32.totalorder %s222, 1
          %s224 = scalar_select %p223, %s222, 1
          %s226 = ssub.s32 128, 128
          %227 = vsyncadd %s217, %s226
          %s228 = smul.addr %s224, 128
          %s229 = scalar_lea.hbm %s0, %s228
          %s231 = sshll.u32 %s220, 4
          %s232 = int_to_ptr.vmem [resolvable:$true] %s231
          %234 = dma.hbm_to_vmem [thread:$0]  %s229, 128, %s232, %s217
        $region20: #{tpu_custom_call.1} parent=15 // pred_fallthru
          _
        // Predicated region
        $region21: #{tpu_custom_call.1} parent=15 // pred_check
          %p235 = pneg %p94
        $region22: #{tpu_custom_call.1} parent=15 // pred_check_branch
          %237 = sbr.rel (%p235) target = $region24
        $region23: #{tpu_custom_call.1} parent=15 // pred_region
          %s238 = sand.u32 %s20, 1
          %s239 = scalar_lea.sflag [#allocation6], %s238
          %s240 = sand.u32 %s84, 1
          %s241 = smul.addr %s240, 8
          %s242 = scalar_lea.vmem [#allocation5], %s241
          %s243 = smul.u32 %s27, 2
          %s244 = sadd.s32 %s243, %s28
          %p245 = scmp.lt.s32.totalorder %s244, 1
          %s246 = scalar_select %p245, %s244, 1
          %s248 = ssub.s32 128, 128
          %249 = vsyncadd %s239, %s248
          %s250 = smul.addr %s246, 128
          %s251 = scalar_lea.hbm %s1, %s250
          %s253 = sshll.u32 %s242, 4
          %s254 = int_to_ptr.vmem [resolvable:$true] %s253
          %256 = dma.hbm_to_vmem [thread:$0]  %s251, 128, %s254, %s239
        $region24: #{tpu_custom_call.1} parent=15 // pred_fallthru
          _
        // Predicated region
        $region25: #{tpu_custom_call.1} parent=15 // pred_check
          %p257 = pneg %p128
        $region26: #{tpu_custom_call.1} parent=15 // pred_check_branch
          %259 = sbr.rel (%p257) target = $region28
        $region27: #{tpu_custom_call.1} parent=15 // pred_region
          %s260 = sand.u32 %s20, 1
          %s261 = scalar_lea.sflag [#allocation6], %s260
          %s262 = sand.u32 %s118, 1
          %s263 = smul.addr %s262, 8
          %s264 = scalar_lea.vmem [#allocation7], %s263
          %s265 = smul.u32 %s27, 2
          %s266 = sadd.s32 %s265, %s28
          %p267 = scmp.lt.s32.totalorder %s266, 1
          %s268 = scalar_select %p267, %s266, 1
          %s270 = ssub.s32 128, 128
          %271 = vsyncadd %s261, %s270
          %s272 = smul.addr %s268, 128
          %s273 = scalar_lea.hbm %s2, %s272
          %s275 = sshll.u32 %s264, 4
          %s276 = int_to_ptr.vmem [resolvable:$true] %s275
          %278 = dma.hbm_to_vmem [thread:$0]  %s273, 128, %s276, %s261
        $region28: #{tpu_custom_call.1} parent=15 // pred_fallthru
          _
        // Predicated region
        $region29: #{tpu_custom_call.1} parent=15 // pred_check
          %p279 = pneg %p162
        $region30: #{tpu_custom_call.1} parent=15 // pred_check_branch
          %281 = sbr.rel (%p279) target = $region32
        $region31: #{tpu_custom_call.1} parent=15 // pred_region
          %s282 = sand.u32 %s152, 1
          %s283 = scalar_lea.sflag [#allocation9], %s282
          %s284 = sand.u32 %s152, 1
          %s285 = smul.addr %s284, 8
          %s286 = scalar_lea.vmem [#allocation8], %s285
          %s287 = smul.u32 %s27, 2
          %s288 = sadd.s32 %s287, %s28
          %p289 = scmp.lt.s32.totalorder %s288, 1
          %s290 = scalar_select %p289, %s288, 1
          %s292 = ssub.s32 128, 128
          %293 = vsyncadd %s283, %s292
          %s294 = smul.addr %s290, 128
          %s295 = scalar_lea.hbm %s3, %s294
          %s297 = sshll.u32 %s286, 4
          %s298 = int_to_ptr.vmem [resolvable:$true] %s297
          %300 = dma.hbm_to_vmem [thread:$0]  %s295, 128, %s298, %s283
        $region32: #{tpu_custom_call.1} parent=15 // pred_fallthru
          _
      $region16: #{tpu_custom_call.1} parent=5 // pred_fallthru
        _
      %p301 = scmp.le.s32.totalorder 1, %s20
      %p302 = scmp.lt.s32.totalorder %s20, 3
      %p303 = pnand %p301, %p302
      %p304 = pneg %p303
      // Predicated region
      $region33: #{tpu_custom_call.1} parent=5 // pred_check
        _
      $region34: #{tpu_custom_call.1} parent=5 // pred_check_branch
        %306 = sbr.rel (%p303) target = $region36
      $region35: #{tpu_custom_call.1} parent=5 // pred_region
        %s307 = ssub.s32 %s20, 1
        %s308 = sand.u32 %s53, 1
        %s309 = scalar_lea.sflag [#allocation3], %s308
        %s310 = sand.u32 %s53, 1
        %s311 = smul.addr %s310, 8
        %s312 = scalar_lea.vmem [#allocation2], %s311
        // Predicated region
        $region37: #{tpu_custom_call.1} parent=35 // pred_check
          %p313 = pneg %p66
        $region38: #{tpu_custom_call.1} parent=35 // pred_check_branch
          %315 = sbr.rel (%p313) target = $region40
        $region39: #{tpu_custom_call.1} parent=35 // pred_region
          %316 = dma.done %s309, 128
        $region40: #{tpu_custom_call.1} parent=35 // pred_fallthru
          _
        %s317 = sand.u32 %s25, 1
        %s318 = scalar_lea.sflag [#allocation6], %s317
        %s319 = sand.u32 %s87, 1
        %s320 = smul.addr %s319, 8
        %s321 = scalar_lea.vmem [#allocation5], %s320
        // Predicated region
        $region41: #{tpu_custom_call.1} parent=35 // pred_check
          %p322 = pneg %p100
        $region42: #{tpu_custom_call.1} parent=35 // pred_check_branch
          %324 = sbr.rel (%p322) target = $region44
        $region43: #{tpu_custom_call.1} parent=35 // pred_region
          %325 = dma.done %s318, 128
        $region44: #{tpu_custom_call.1} parent=35 // pred_fallthru
          _
        %s326 = sand.u32 %s25, 1
        %s327 = scalar_lea.sflag [#allocation6], %s326
        %s328 = sand.u32 %s121, 1
        %s329 = smul.addr %s328, 8
        %s330 = scalar_lea.vmem [#allocation7], %s329
        // Predicated region
        $region45: #{tpu_custom_call.1} parent=35 // pred_check
          %p331 = pneg %p134
        $region46: #{tpu_custom_call.1} parent=35 // pred_check_branch
          %333 = sbr.rel (%p331) target = $region48
        $region47: #{tpu_custom_call.1} parent=35 // pred_region
          %334 = dma.done %s327, 128
        $region48: #{tpu_custom_call.1} parent=35 // pred_fallthru
          _
        %s335 = sand.u32 %s155, 1
        %s336 = scalar_lea.sflag [#allocation9], %s335
        %s337 = sand.u32 %s155, 1
        %s338 = smul.addr %s337, 8
        %s339 = scalar_lea.vmem [#allocation8], %s338
        // Predicated region
        $region49: #{tpu_custom_call.1} parent=35 // pred_check
          %p340 = pneg %p168
        $region50: #{tpu_custom_call.1} parent=35 // pred_check_branch
          %342 = sbr.rel (%p340) target = $region52
        $region51: #{tpu_custom_call.1} parent=35 // pred_region
          %343 = dma.done %s336, 128
        $region52: #{tpu_custom_call.1} parent=35 // pred_fallthru
          _
        %s344 = sand.u32 %s53, 1
        %s345 = scalar_lea.sflag [#allocation3], %s344
        %s346 = sand.u32 %s53, 1
        %s347 = smul.addr %s346, 8
        %s348 = scalar_lea.vmem [#allocation2], %s347
        %p349 = pneg %p66
        %p350 = pneg %p63
        %s351 = sand.u32 %s25, 1
        %s352 = scalar_lea.sflag [#allocation6], %s351
        %s353 = sand.u32 %s87, 1
        %s354 = smul.addr %s353, 8
        %s355 = scalar_lea.vmem [#allocation5], %s354
        %p356 = pneg %p100
        %p357 = pneg %p97
        %s358 = sand.u32 %s25, 1
        %s359 = scalar_lea.sflag [#allocation6], %s358
        %s360 = sand.u32 %s121, 1
        %s361 = smul.addr %s360, 8
        %s362 = scalar_lea.vmem [#allocation7], %s361
        %p363 = pneg %p134
        %p364 = pneg %p131
        %s365 = sand.u32 %s155, 1
        %s366 = scalar_lea.sflag [#allocation9], %s365
        %s367 = sand.u32 %s155, 1
        %s368 = smul.addr %s367, 8
        %s369 = scalar_lea.vmem [#allocation8], %s368
        %p370 = pneg %p168
        %p371 = pneg %p165
        %p372 = pneg %p194
        %p373 = pneg %p191
        %s374 = smul.u32 %s29, 2
        %s375 = sadd.s32 %s374, %s30
        %p376 = scmp.lt.s32.totalorder %s375, 1
        %s377 = scalar_select %p376, %s375, 1
        %s378 = smul.u32 %s29, 2
        %s379 = sadd.s32 %s378, %s30
        %p380 = scmp.lt.s32.totalorder %s379, 1
        %s381 = scalar_select %p380, %s379, 1
        %s382 = smul.u32 %s29, 2
        %s383 = sadd.s32 %s382, %s30
        %p384 = scmp.lt.s32.totalorder %s383, 1
        %s385 = scalar_select %p384, %s383, 1
        %s386 = smul.u32 %s29, 2
        %s387 = sadd.s32 %s386, %s30
        %p388 = scmp.lt.s32.totalorder %s387, 1
        %s389 = scalar_select %p388, %s387, 1
        %p390 = scmp.eq.s32.totalorder %s30, 0
        // Predicated region
        $region53: #{tpu_custom_call.1} parent=35 // pred_check
          %p391 = pneg %p390
        $region54: #{tpu_custom_call.1} parent=35 // pred_check_branch
          %393 = sbr.rel (%p391) target = $region56
        $region55: #{tpu_custom_call.1} parent=35 // pred_region
          %vm394 = vcmask 261120
          %395 = vst.msk [vmem:[#allocation10] sm:$0xff] %vm394, 0.0
          %396 = vst.msk [vmem:[#allocation10 + $0x8] sm:$0xff] %vm394, 0.0
          %397 = vst.msk [vmem:[#allocation10 + $0x10] sm:$0xff] %vm394, 0.0
          %398 = vst.msk [vmem:[#allocation10 + $0x18] sm:$0xff] %vm394, 0.0
        $region56: #{tpu_custom_call.1} parent=35 // pred_fallthru
          _
        %v399 = vld [vmem:[%s312] sm:$0xff]
        %v400 = vld [vmem:[%s321] sm:$0xff]
        %v401 = vld [vmem:[%s330] sm:$0xff]
        %v402 = vld [vmem:[%s339] sm:$0xff]
        %v403 = vsub.f32 %v399, %v401
        %v404 = vsub.f32 %v400, %v402
        %v405 = vsub.f32 %v400, %v399
        %v406 = vsub.f32 %v402, %v401
        %v407 = vmul.f32 %v403, %v403
        %v408 = vmul.f32 %v404, %v404
        %v409 = vmul.f32 %v405, %v405
        %v410 = vmul.f32 %v406, %v406
        %v411 = vld [vmem:[#allocation10] sm:$0xff]
        %v412 = vadd.f32 %v407, 0.0
        %v413 = vadd.f32 %v411, %v412
        %vm414 = vcmask 261120
        %415 = vst.msk [vmem:[#allocation10] sm:$0xff] %vm414, %v413
        %s416 = scalar_lea.vmem [#allocation10], 8
        %v417 = vld [vmem:[%s416] sm:$0xff]
        %v418 = vadd.f32 %v408, 0.0
        %v419 = vadd.f32 %v417, %v418
        %420 = vst.msk [vmem:[%s416] sm:$0xff] %vm414, %v419
        %s421 = scalar_lea.vmem [#allocation10], 16
        %v422 = vld [vmem:[%s421] sm:$0xff]
        %v423 = vadd.f32 %v409, 0.0
        %v424 = vadd.f32 %v422, %v423
        %425 = vst.msk [vmem:[%s421] sm:$0xff] %vm414, %v424
        %s426 = scalar_lea.vmem [#allocation10], 24
        %v427 = vld [vmem:[%s426] sm:$0xff]
        %v428 = vadd.f32 %v410, 0.0
        %v429 = vadd.f32 %v427, %v428
        %430 = vst.msk [vmem:[%s426] sm:$0xff] %vm414, %v429
        // Predicated region
        $region57: #{tpu_custom_call.1} parent=35 // pred_check
          %p431 = pneg %p191
        $region58: #{tpu_custom_call.1} parent=35 // pred_check_branch
          %433 = sbr.rel (%p431) target = $region60
        $region59: #{tpu_custom_call.1} parent=35 // pred_region
          %s435 = ssub.s32 512, 512
          %436 = vsyncadd [#allocation4], %s435
          %s437 = smul.addr %s29, 4
          %s438 = smul.addr %s437, 128
          %s439 = scalar_lea.hbm %s4, %s438
          %s440 = sshll.u32 [#allocation10], 4
          %s441 = int_to_ptr.vmem [resolvable:$true] %s440
          %446 = dma.vmem_to_hbm [thread:$0]  %s441, 512, %s439, [#allocation4], 128, 128, 8
        $region60: #{tpu_custom_call.1} parent=35 // pred_fallthru
          _
        // Predicated region
        $region61: #{tpu_custom_call.1} parent=35 // pred_check
          %p447 = pneg %p191
        $region62: #{tpu_custom_call.1} parent=35 // pred_check_branch
          %449 = sbr.rel (%p447) target = $region64
        $region63: #{tpu_custom_call.1} parent=35 // pred_region
          %450 = dma.done [#allocation4], 512
        $region64: #{tpu_custom_call.1} parent=35 // pred_fallthru
          _
      $region36: #{tpu_custom_call.1} parent=5 // pred_fallthru
        _
      %p451 = scmp.le.s32.totalorder 2, %s20
      // Predicated region
      $region65: #{tpu_custom_call.1} parent=5 // pred_check
        %p452 = pneg %p451
      $region66: #{tpu_custom_call.1} parent=5 // pred_check_branch
        %454 = sbr.rel (%p452) target = $region68
      $region67: #{tpu_custom_call.1} parent=5 // pred_region
        %s455 = ssub.s32 %s20, 2
      $region68: #{tpu_custom_call.1} parent=5 // pred_fallthru
        _
    $region6: #{tpu_custom_call.1} parent=1 // loop_footer
      %s24 = sadd.s32 1, %s20
    $region7: #{tpu_custom_call.1} parent=1 // loop_footer_branch
      %19 = sbr.rel target = $region3
    $region8: #{tpu_custom_call.1} parent=1 // loop_exit
      _
    %456 = vsyncpa [#allocation3], 1
    %s457 = scalar_lea.sflag [#allocation3], 1
    %458 = vsyncpa %s457, 1
    %459 = vsyncpa [#allocation6], 1
    %s460 = scalar_lea.sflag [#allocation6], 1
    %461 = vsyncpa %s460, 1
    %462 = vsyncpa [#allocation9], 1
    %s463 = scalar_lea.sflag [#allocation9], 1
    %464 = vsyncpa %s463, 1
    %465 = vsyncpa [#allocation4], 1
    %s466 = scalar_lea.sflag [#allocation4], 1
    %467 = vsyncpa %s466, 1

</llo_original>
